<compile_context>
chip_gen: v6e
topology: v6e:2x2x1
jax: 0.10.0
libtpu: 0.0.40
codegen_flags: <defaults>
</compile_context>

<pallas_src>
import jax
import jax.numpy as jnp
from jax.experimental import pallas as pl
from jax.experimental.pallas import tpu as pltpu

FEATURES_DIM = 150
HIDDEN = FEATURES_DIM // 2      # 75 (PyTorch module's fc1 output size)
HIDDEN_PAD = 128                # padded to the 128-lane boundary
NUM_ACTIONS = 2


def _round_up(n, m):
    return (n + m - 1) // m * m


def _choose_tile_b(batch, requested):
    """Pick a batch tile: multiple of 8, >=4 grid steps for large B (v7x 2-TC),
    capped at `requested`, never larger than the 8-rounded batch."""
    t = min(requested, max(512, _round_up(pl.cdiv(batch, 4), 8)))
    t = min(t, _round_up(batch, 8))
    return max(t, 8)


def qnet_kernel(x_ref, w1_ref, b1_ref, w2d_ref, b2d_ref, out_ref):
    x = x_ref[...]                                                   # (tb, F) f32

    # fc1 + ReLU (hidden padded to 128 lanes; padded w1 cols / b1 entries are 0)
    h = jnp.dot(x, w1_ref[...], preferred_element_type=jnp.float32) + b1_ref[...]
    h = jnp.maximum(h, 0.0)                                          # (tb, 128)

    # Folded fc2: logit difference d = h @ (w2[:,1]-w2[:,0]) + (b2[1]-b2[0]).
    d = jnp.dot(h, w2d_ref[...], preferred_element_type=jnp.float32) + b2d_ref[0, 0]

    # 2-class softmax == sigmoid of the logit difference; exp + reciprocal on EUP.
    p1 = pl.reciprocal(1.0 + jnp.exp(-d), approx=True)               # (tb, 1)

    # Two static-slice stores (no iota/where epilogue).
    out_ref[:, 0:1] = 1.0 - p1
    out_ref[:, 1:2] = p1


def focusing_action_filter_qnet(features, w1p, b1p, w2d, b2d, *, tile_b=4096):
    """features: (B, F) f32; w1p: (F, 128); b1p: (1, 128); w2d: (128, 1); b2d: (1, 1)."""
    B, F = features.shape
    tile_b = _choose_tile_b(B, tile_b)
    grid = (pl.cdiv(B, tile_b),)     # partial last block handled by Pallas; no pad copy

    flops = 2 * B * F * HIDDEN_PAD + 2 * B * HIDDEN_PAD + 6 * B
    bytes_accessed = 4 * (
        B * F                                   # features in
        + F * HIDDEN_PAD + HIDDEN_PAD           # w1, b1
        + HIDDEN_PAD + 1                        # w2d, b2d
        + B * NUM_ACTIONS                       # output
    )

    out = pl.pallas_call(
        qnet_kernel,
        out_shape=jax.ShapeDtypeStruct((B, NUM_ACTIONS), jnp.float32),
        grid=grid,
        in_specs=[
            pl.BlockSpec((tile_b, F), lambda i: (i, 0)),              # features: tiled on batch
            pl.BlockSpec((F, HIDDEN_PAD), lambda i: (0, 0)),          # w1: VMEM-resident
            pl.BlockSpec((1, HIDDEN_PAD), lambda i: (0, 0)),          # b1: VMEM-resident
            pl.BlockSpec((HIDDEN_PAD, 1), lambda i: (0, 0)),          # w2 diff: VMEM-resident
            pl.BlockSpec(memory_space=pltpu.MemorySpace.SMEM),        # b2 diff scalar
        ],
        out_specs=pl.BlockSpec((tile_b, NUM_ACTIONS), lambda i: (i, 0)),
        compiler_params=pltpu.CompilerParams(
            dimension_semantics=("parallel",),
            vmem_limit_bytes=48 * 1024 * 1024,   # room for tile_b=4096 double-buffered
        ),
        cost_estimate=pl.CostEstimate(
            flops=flops, transcendentals=2 * B, bytes_accessed=bytes_accessed
        ),
    )(features, w1p, b1p, w2d, b2d)

    return out


def init_params(key, features_dim=FEATURES_DIM):
    """Synthetic PyTorch-Linear-style params in (in_dim, out_dim) layout."""
    hidden = features_dim // 2
    k1, k2, k3, k4 = jax.random.split(key, 4)
    lim1 = 1.0 / jnp.sqrt(features_dim)
    lim2 = 1.0 / jnp.sqrt(hidden)
    w1 = jax.random.uniform(k1, (features_dim, hidden), jnp.float32, -lim1, lim1)
    b1 = jax.random.uniform(k2, (1, hidden), jnp.float32, -lim1, lim1)
    w2 = jax.random.uniform(k3, (hidden, 2), jnp.float32, -lim2, lim2)
    b2 = jax.random.uniform(k4, (1, 2), jnp.float32, -lim2, lim2)
    return w1, b1, w2, b2


def prepare_params(w1, b1, w2, b2, hidden_pad=HIDDEN_PAD):
    """Zero-pad hidden 75->128 (math-preserving) and fold fc2 into a logit
    difference: w2d = w2[:,1]-w2[:,0], b2d = b2[1]-b2[0]."""
    hidden = w1.shape[1]
    pad = hidden_pad - hidden
    w1p = jnp.pad(w1, ((0, 0), (0, pad)))            # extra output cols are 0
    b1p = jnp.pad(b1, ((0, 0), (0, pad)))            # pad bias = 0 -> ReLU(0) = 0
    w2d = jnp.pad(w2[:, 1:2] - w2[:, 0:1], ((0, pad), (0, 0)))   # (128, 1), zero rows
    b2d = (b2[:, 1:2] - b2[:, 0:1]).reshape(1, 1)                # (1, 1) scalar
    return w1p, b1p, w2d, b2d


if __name__ == "__main__":
    features_dim = FEATURES_DIM
    batch = 4

    key = jax.random.PRNGKey(0)
    kx, kp, ka, kb = jax.random.split(key, 4)

    # Forward takes a tuple (features, _, _); the last two entries are ignored.
    features = jax.random.normal(kx, (batch, features_dim), jnp.float32)
    unused_a = jax.random.normal(ka, (batch, 3), jnp.float32)
    unused_b = jax.random.normal(kb, (batch, 3), jnp.float32)
    x = (features, unused_a, unused_b)

    w1, b1, w2, b2 = init_params(kp, features_dim)
    w1p, b1p, w2d, b2d = prepare_params(w1, b1, w2, b2)

    feats, _, _ = x
    out = focusing_action_filter_qnet(feats, w1p, b1p, w2d, b2d)
    out = jax.block_until_ready(out)

    # Pure-JAX reference (un-padded params) for correctness check.
    h_ref = jnp.maximum(feats @ w1 + b1, 0.0)
    ref = jax.nn.softmax(h_ref @ w2 + b2, axis=1)

    assert out.shape == (batch, 2)
    # approx=True reciprocal on the EUP: ample accuracy for probabilities.
    assert jnp.allclose(out, ref, atol=1e-3, rtol=1e-3)
    assert jnp.allclose(jnp.sum(out, axis=1), 1.0, atol=1e-5)

    print("KERNEL_OK")
</pallas_src>

<mosaic_0001>
module attributes {stable_mosaic.version = 11 : i64} {
  func.func @qnet_kernel(%arg0: i32, %arg1: memref<8x150xf32, #tpu.memory_space<vmem>>, %arg2: memref<150x128xf32, #tpu.memory_space<vmem>>, %arg3: memref<1x128xf32, #tpu.memory_space<vmem>>, %arg4: memref<128x1xf32, #tpu.memory_space<vmem>>, %arg5: memref<1x1xf32, #tpu.memory_space<smem>>, %arg6: memref<8x2xf32, #tpu.memory_space<vmem>>) attributes {dimension_semantics = [#tpu.dimension_semantics<parallel>], iteration_bounds = array<i64: 1>, scalar_prefetch = 0 : i64, scratch_operands = 0 : i64, tpu.core_type = #tpu.core_type<tc>, window_params = [{transform_indices = @transform_0, window_bounds = array<i64: 8, 150>}, {pipeline_mode = #tpu.pipeline_mode<synchronous>, transform_indices = @transform_1, window_bounds = array<i64: 150, 128>}, {pipeline_mode = #tpu.pipeline_mode<synchronous>, transform_indices = @transform_2, window_bounds = array<i64: 1, 128>}, {pipeline_mode = #tpu.pipeline_mode<synchronous>, transform_indices = @transform_3, window_bounds = array<i64: 128, 1>}, {transform_indices = @transform_4, window_bounds = array<i64: 1, 1>}, {transform_indices = @transform_5, window_bounds = array<i64: 8, 2>}]} {
    %c0 = arith.constant 0 : index
    %c0_0 = arith.constant 0 : index
    %0 = vector.load %arg1[%c0, %c0_0] : memref<8x150xf32, #tpu.memory_space<vmem>>, vector<8x150xf32>
    %c0_1 = arith.constant 0 : index
    %c0_2 = arith.constant 0 : index
    %1 = vector.load %arg2[%c0_1, %c0_2] : memref<150x128xf32, #tpu.memory_space<vmem>>, vector<150x128xf32>
    %cst = arith.constant dense<0.000000e+00> : vector<8x128xf32>
    %2 = tpu.matmul %0, %1, %cst {dimension_numbers = #tpu.dot_dimension_numbers<[1], [0], [0], [1], [0, 0, 1, 1], [], []>} : vector<8x150xf32>, vector<150x128xf32>, vector<8x128xf32> -> vector<8x128xf32>
    %c0_3 = arith.constant 0 : index
    %c0_4 = arith.constant 0 : index
    %3 = vector.load %arg3[%c0_3, %c0_4] : memref<1x128xf32, #tpu.memory_space<vmem>>, vector<1x128xf32>
    %4 = vector.broadcast %3 : vector<1x128xf32> to vector<8x128xf32>
    %5 = arith.addf %2, %4 : vector<8x128xf32>
    %cst_5 = arith.constant 0.000000e+00 : f32
    %6 = vector.broadcast %cst_5 : f32 to vector<8x128xf32>
    %7 = arith.maximumf %5, %6 : vector<8x128xf32>
    %c0_6 = arith.constant 0 : index
    %c0_7 = arith.constant 0 : index
    %8 = vector.load %arg4[%c0_6, %c0_7] : memref<128x1xf32, #tpu.memory_space<vmem>>, vector<128x1xf32>
    %cst_8 = arith.constant dense<0.000000e+00> : vector<8x1xf32>
    %9 = tpu.matmul %7, %8, %cst_8 {dimension_numbers = #tpu.dot_dimension_numbers<[1], [0], [0], [1], [0, 0, 1, 1], [], []>} : vector<8x128xf32>, vector<128x1xf32>, vector<8x1xf32> -> vector<8x1xf32>
    %c0_9 = arith.constant 0 : index
    %c0_10 = arith.constant 0 : index
    %10 = memref.load %arg5[%c0_9, %c0_10] : memref<1x1xf32, #tpu.memory_space<smem>>
    %11 = vector.broadcast %10 : f32 to vector<8x1xf32>
    %12 = arith.addf %9, %11 : vector<8x1xf32>
    %cst_11 = arith.constant 0.000000e+00 : f32
    %13 = vector.broadcast %cst_11 : f32 to vector<8x1xf32>
    %14 = arith.subf %13, %12 : vector<8x1xf32>
    %15 = math.exp %14 : vector<8x1xf32>
    %cst_12 = arith.constant 1.000000e+00 : f32
    %16 = vector.broadcast %cst_12 : f32 to vector<8x1xf32>
    %17 = arith.addf %16, %15 : vector<8x1xf32>
    %18 = tpu.reciprocal %17 {approx = true} : vector<8x1xf32> -> vector<8x1xf32>
    %cst_13 = arith.constant 1.000000e+00 : f32
    %19 = vector.broadcast %cst_13 : f32 to vector<8x1xf32>
    %20 = arith.subf %19, %18 : vector<8x1xf32>
    %c0_14 = arith.constant 0 : index
    %c0_15 = arith.constant 0 : index
    %21 = vector.load %arg6[%c0_14, %c0_15] : memref<8x2xf32, #tpu.memory_space<vmem>>, vector<8x1xf32>
    tpu.vector_store %arg6[%c0_14, %c0_15], %20 {strides = array<i32>} : memref<8x2xf32, #tpu.memory_space<vmem>>, vector<8x1xf32>,
    %c0_16 = arith.constant 0 : index
    %c1 = arith.constant 1 : index
    %22 = vector.load %arg6[%c0_16, %c1] : memref<8x2xf32, #tpu.memory_space<vmem>>, vector<8x1xf32>
    tpu.vector_store %arg6[%c0_16, %c1], %18 {strides = array<i32>} : memref<8x2xf32, #tpu.memory_space<vmem>>, vector<8x1xf32>,
    return
  }
  func.func @transform_0(%arg0: i32) -> (i32, i32) {
    %c0_i32 = arith.constant 0 : i32
    %c0_i32_0 = arith.constant 0 : i32
    return %arg0, %c0_i32 : i32, i32
  }
  func.func @transform_1(%arg0: i32) -> (i32, i32) {
    %c0_i32 = arith.constant 0 : i32
    %c0_i32_0 = arith.constant 0 : i32
    %c0_i32_1 = arith.constant 0 : i32
    return %c0_i32, %c0_i32_0 : i32, i32
  }
  func.func @transform_2(%arg0: i32) -> (i32, i32) {
    %c0_i32 = arith.constant 0 : i32
    %c0_i32_0 = arith.constant 0 : i32
    %c0_i32_1 = arith.constant 0 : i32
    return %c0_i32, %c0_i32_0 : i32, i32
  }
  func.func @transform_3(%arg0: i32) -> (i32, i32) {
    %c0_i32 = arith.constant 0 : i32
    %c0_i32_0 = arith.constant 0 : i32
    %c0_i32_1 = arith.constant 0 : i32
    return %c0_i32, %c0_i32_0 : i32, i32
  }
  func.func @transform_4(%arg0: i32) -> (i32, i32) {
    %c0_i32 = arith.constant 0 : i32
    %c0_i32_0 = arith.constant 0 : i32
    %c0_i32_1 = arith.constant 0 : i32
    return %c0_i32, %c0_i32_0 : i32, i32
  }
  func.func @transform_5(%arg0: i32) -> (i32, i32) {
    %c0_i32 = arith.constant 0 : i32
    %c0_i32_0 = arith.constant 0 : i32
    return %arg0, %c0_i32 : i32, i32
  }
}

</mosaic_0001>

<llo_original>
// kernel: tpu_custom_call.1
$region0: #{tpu_custom_call.1}
  #allocation0 [shape = 'u32[]', space=smem, size = 0x4, offset = 0x4, fixed_abs, tag = 'smem constant byte address 0x4 - core index']
  #allocation1 [shape = 'u32[144,128]{1,0:T(1,128)}', space=vmem, size = 0x12000, scoped, tag = 'internal scratch']
  #allocation2 [shape = 'f32[1,1]{1,0:T(1,128)S(6)}', space=smem, size = 0x200, scoped, tag = 'scoped memory for tpu_custom_call.1']
  %s0 = inlined_call_operand.vmem [shape: f32[4,150], index: 0, kind: input, shape index: {}]
  %s1 = inlined_call_operand.hbm [shape: f32[150,128], index: 1, kind: input, shape index: {}]
  %s2 = inlined_call_operand.vmem [shape: f32[1,128], index: 2, kind: input, shape index: {}]
  %s3 = inlined_call_operand.vmem [shape: f32[128,1], index: 3, kind: input, shape index: {}]
  %s4 = inlined_call_operand.<no memory space> [shape: f32[1,1], index: 4, kind: input, shape index: {}]
  %s5 = inlined_call_operand.vmem [shape: f32[4,2], index: 5, kind: output, shape index: {}]
  %s6 = sld [smem:[#allocation0]]
  $region64: #{tpu_custom_call.1} parent=0
    _
  %s8 = ssub.s32 1, %s6
  %s9 = scalar_select 0, %s8, %s6
  %10 = sst [smem:[#allocation2]] %s4
  $region1: #{tpu_custom_call.1} parent=0
    #allocation3 [shape = 'u8[77824]{0}', space=vmem, size = 0x13000, scoped, tag = 'input window, operand 1, single buffered']
    #allocation4 [shape = 's32[1]{0}', space=sflag, size = 0x4, scoped, tag = 'scoped memory for tpu_custom_call.1']
    #allocation5 [shape = 'u8[4096]{0}', space=vmem, size = 0x1000, scoped, tag = 'output window, operand 0, single buffered']
    %11 = vsyncpa [#allocation4], 0
    // Predicated region
    $region2: #{tpu_custom_call.1} parent=1 // pred_check
      _
    $region3: #{tpu_custom_call.1} parent=1 // pred_check_branch
      %13 = sbr.rel (0) target = $region5
    $region4: #{tpu_custom_call.1} parent=1 // pred_region
      _
    $region5: #{tpu_custom_call.1} parent=1 // pred_fallthru
      _
    // Predicated region
    $region6: #{tpu_custom_call.1} parent=1 // pred_check
      _
    $region7: #{tpu_custom_call.1} parent=1 // pred_check_branch
      %15 = sbr.rel (0) target = $region9
    $region8: #{tpu_custom_call.1} parent=1 // pred_region
      %s17 = ssub.s32 2432, 2432
      %18 = vsyncadd [#allocation4], %s17
      %s19 = sshll.u32 [#allocation3], 4
      %s20 = int_to_ptr.vmem [resolvable:$true] %s19
      %25 = dma.hbm_to_vmem [thread:$0]  %s1, 2432, %s20, [#allocation4], 128, 128, 8
    $region9: #{tpu_custom_call.1} parent=1 // pred_fallthru
      _
    // Predicated region
    $region10: #{tpu_custom_call.1} parent=1 // pred_check
      _
    $region11: #{tpu_custom_call.1} parent=1 // pred_check_branch
      %27 = sbr.rel (0) target = $region13
    $region12: #{tpu_custom_call.1} parent=1 // pred_region
      _
    $region13: #{tpu_custom_call.1} parent=1 // pred_fallthru
      _
    // Predicated region
    $region14: #{tpu_custom_call.1} parent=1 // pred_check
      _
    $region15: #{tpu_custom_call.1} parent=1 // pred_check_branch
      %29 = sbr.rel (0) target = $region17
    $region16: #{tpu_custom_call.1} parent=1 // pred_region
      _
    $region17: #{tpu_custom_call.1} parent=1 // pred_fallthru
      _
    // Predicated region
    $region18: #{tpu_custom_call.1} parent=1 // pred_check
      _
    $region19: #{tpu_custom_call.1} parent=1 // pred_check_branch
      %31 = sbr.rel (0) target = $region21
    $region20: #{tpu_custom_call.1} parent=1 // pred_region
      _
    $region21: #{tpu_custom_call.1} parent=1 // pred_fallthru
      _
    // Predicated region
    $region22: #{tpu_custom_call.1} parent=1 // pred_check
      _
    $region23: #{tpu_custom_call.1} parent=1 // pred_check_branch
      %33 = sbr.rel (0) target = $region25
    $region24: #{tpu_custom_call.1} parent=1 // pred_region
      %34 = dma.done [#allocation4], 2432
    $region25: #{tpu_custom_call.1} parent=1 // pred_fallthru
      _
    %v35 = vld [vmem:[%s0] sm:$0xff]
    %v36 = vld [vmem:[%s0 + $0x8] sm:$0xff]
    %v37 = vld [vmem:[#allocation3] sm:$0xff]
    %v38 = vld [vmem:[#allocation3 + $0x8] sm:$0xff]
    %v39 = vld [vmem:[#allocation3 + $0x10] sm:$0xff]
    %v40 = vld [vmem:[#allocation3 + $0x18] sm:$0xff]
    %v41 = vld [vmem:[#allocation3 + $0x20] sm:$0xff]
    %v42 = vld [vmem:[#allocation3 + $0x28] sm:$0xff]
    %v43 = vld [vmem:[#allocation3 + $0x30] sm:$0xff]
    %v44 = vld [vmem:[#allocation3 + $0x38] sm:$0xff]
    %v45 = vld [vmem:[#allocation3 + $0x40] sm:$0xff]
    %v46 = vld [vmem:[#allocation3 + $0x48] sm:$0xff]
    %v47 = vld [vmem:[#allocation3 + $0x50] sm:$0xff]
    %v48 = vld [vmem:[#allocation3 + $0x58] sm:$0xff]
    %v49 = vld [vmem:[#allocation3 + $0x60] sm:$0xff]
    %v50 = vld [vmem:[#allocation3 + $0x68] sm:$0xff]
    %v51 = vld [vmem:[#allocation3 + $0x70] sm:$0xff]
    %v52 = vld [vmem:[#allocation3 + $0x78] sm:$0xff]
    %v53 = vld [vmem:[#allocation3 + $0x80] sm:$0xff]
    %v54 = vld [vmem:[#allocation3 + $0x88] sm:$0xff]
    %v55 = vld [vmem:[#allocation3 + $0x90] sm:$0x3f]
    %v56 = vld [vmem:[%s2] sm:$0x1]
    %v58 = vlaneseq
    %v59 = vshrl.u32 %v58, 7
    %v60 = vsub.s32 0, %v59
    %v61 = vrot.slane %v56, %v60
    %v65 = vcombine.low %v35, %v36
    %v66 = vcombine.high %v35, %v36
    %vm68 = vcmask 179200
    %v69 = vsel %vm68, %v66, 0
    %vm71 = vcmask 1045504
    %v73 = vsel %vm71, %v55, 0
    %75 = vmatprep.subr.mxu0 0.0
    %76 = vmatpush1.msra.mxu0 %v52
    %77 = vmatprep.subr.mxu0 0.0
    %78 = vmatpush1.msra.mxu0 %v51
    %79 = vmatprep.subr.mxu0 0.0
    %80 = vmatpush1.msra.mxu0 %v50
    %81 = vmatprep.subr.mxu0 0.0
    %82 = vmatpush1.msra.mxu0 %v49
    %83 = vmatprep.subr.mxu0 0.0
    %84 = vmatpush1.msra.mxu0 %v48
    %85 = vmatprep.subr.mxu0 0.0
    %86 = vmatpush1.msra.mxu0 %v47
    %87 = vmatprep.subr.mxu0 0.0
    %88 = vmatpush1.msra.mxu0 %v46
    %89 = vmatprep.subr.mxu0 0.0
    %90 = vmatpush1.msra.mxu0 %v45
    %91 = vmatprep.subr.mxu0 0.0
    %92 = vmatpush1.msra.mxu0 %v44
    %93 = vmatprep.subr.mxu0 0.0
    %94 = vmatpush1.msra.mxu0 %v43
    %95 = vmatprep.subr.mxu0 0.0
    %96 = vmatpush1.msra.mxu0 %v42
    %97 = vmatprep.subr.mxu0 0.0
    %98 = vmatpush1.msra.mxu0 %v41
    %99 = vmatprep.subr.mxu0 0.0
    %100 = vmatpush1.msra.mxu0 %v40
    %101 = vmatprep.subr.mxu0 0.0
    %102 = vmatpush1.msra.mxu0 %v39
    %103 = vmatprep.subr.mxu0 0.0
    %104 = vmatpush1.msra.mxu0 %v38
    %105 = vmatprep.subr.mxu0 0.0
    %106 = vmatpush1.msra.mxu0 %v37
    %107 = vmatprep.subr.mxu0 0.0
    %108 = vmatpush2.msra.mxu0 0.0
    %109 = vmatprep.subr.mxu0 0.0
    %110 = vmatpush2.msra.mxu0 0.0
    %111 = vmatprep.subr.mxu0 0.0
    %112 = vmatpush2.msra.mxu0 0.0
    %113 = vmatprep.subr.mxu0 0.0
    %114 = vmatpush2.msra.mxu0 0.0
    %115 = vmatprep.subr.mxu0 0.0
    %116 = vmatpush2.msra.mxu0 0.0
    %117 = vmatprep.subr.mxu0 0.0
    %118 = vmatpush2.msra.mxu0 0.0
    %119 = vmatprep.subr.mxu0 0.0
    %120 = vmatpush2.msra.mxu0 0.0
    %121 = vmatprep.subr.mxu0 0.0
    %122 = vmatpush2.msra.mxu0 0.0
    %123 = vmatprep.subr.mxu0 0.0
    %124 = vmatpush2.msra.mxu0 0.0
    %125 = vmatprep.subr.mxu0 0.0
    %126 = vmatpush2.msra.mxu0 0.0
    %127 = vmatprep.subr.mxu0 0.0
    %128 = vmatpush2.msra.mxu0 0.0
    %129 = vmatprep.subr.mxu0 0.0
    %130 = vmatpush2.msra.mxu0 0.0
    %131 = vmatprep.subr.mxu0 0.0
    %132 = vmatpush2.msra.mxu0 0.0
    %133 = vmatprep.subr.mxu0 0.0
    %134 = vmatpush2.msra.mxu0 %v73
    %135 = vmatprep.subr.mxu0 0.0
    %136 = vmatpush2.msra.mxu0 %v54
    %137 = vmatprep.subr.mxu0 0.0
    %138 = vmatpush2.msra.mxu0 %v53
    %139 = vmatprep.mubr.f32.mxu0 %v69
    %140 = vmatmul.mubr.f32.gmra.mxu0 %v65
    %v141 = vpop.f32.mrf.mxu0
    %v142 = vadd.f32 %v61, %v141
    %v143 = vpop.f32.mrf.mxu0
    %144 = vdwg.mxu0
    %v145 = vmax.f32 %v142, 0.0
    %v146 = vld [vmem:[%s3] sm:$0xff]
    %v147 = vld [vmem:[%s3 + $0x8] sm:$0xff]
    %v148 = vld [vmem:[%s3 + $0x10] sm:$0xff]
    %v149 = vld [vmem:[%s3 + $0x18] sm:$0xff]
    %v150 = vld [vmem:[%s3 + $0x20] sm:$0xff]
    %v151 = vld [vmem:[%s3 + $0x28] sm:$0xff]
    %v152 = vld [vmem:[%s3 + $0x30] sm:$0xff]
    %v153 = vld [vmem:[%s3 + $0x38] sm:$0xff]
    %v154 = vld [vmem:[%s3 + $0x40] sm:$0xff]
    %v155 = vld [vmem:[%s3 + $0x48] sm:$0xff]
    %v156 = vld [vmem:[%s3 + $0x50] sm:$0xff]
    %v157 = vld [vmem:[%s3 + $0x58] sm:$0xff]
    %v158 = vld [vmem:[%s3 + $0x60] sm:$0xff]
    %v159 = vld [vmem:[%s3 + $0x68] sm:$0xff]
    %v160 = vld [vmem:[%s3 + $0x70] sm:$0xff]
    %v161 = vld [vmem:[%s3 + $0x78] sm:$0xff]
    %s162 = sld [smem:[#allocation2]]
    %v163 = vstv %s162
    %164 = vmatprep.subr.mxu0 0.0
    %165 = vmatpush1.msra.mxu0 %v161
    %166 = vmatprep.subr.mxu0 0.0
    %167 = vmatpush1.msra.mxu0 %v160
    %168 = vmatprep.subr.mxu0 0.0
    %169 = vmatpush1.msra.mxu0 %v159
    %170 = vmatprep.subr.mxu0 0.0
    %171 = vmatpush1.msra.mxu0 %v158
    %172 = vmatprep.subr.mxu0 0.0
    %173 = vmatpush1.msra.mxu0 %v157
    %174 = vmatprep.subr.mxu0 0.0
    %175 = vmatpush1.msra.mxu0 %v156
    %176 = vmatprep.subr.mxu0 0.0
    %177 = vmatpush1.msra.mxu0 %v155
    %178 = vmatprep.subr.mxu0 0.0
    %179 = vmatpush1.msra.mxu0 %v154
    %180 = vmatprep.subr.mxu0 0.0
    %181 = vmatpush1.msra.mxu0 %v153
    %182 = vmatprep.subr.mxu0 0.0
    %183 = vmatpush1.msra.mxu0 %v152
    %184 = vmatprep.subr.mxu0 0.0
    %185 = vmatpush1.msra.mxu0 %v151
    %186 = vmatprep.subr.mxu0 0.0
    %187 = vmatpush1.msra.mxu0 %v150
    %188 = vmatprep.subr.mxu0 0.0
    %189 = vmatpush1.msra.mxu0 %v149
    %190 = vmatprep.subr.mxu0 0.0
    %191 = vmatpush1.msra.mxu0 %v148
    %192 = vmatprep.subr.mxu0 0.0
    %193 = vmatpush1.msra.mxu0 %v147
    %194 = vmatprep.subr.mxu0 0.0
    %195 = vmatpush1.msra.mxu0 %v146
    %196 = vmatprep.subr.mxu0 0.0
    %197 = vmatpush2.msra.mxu0 0.0
    %198 = vmatprep.subr.mxu0 0.0
    %199 = vmatpush2.msra.mxu0 0.0
    %200 = vmatprep.subr.mxu0 0.0
    %201 = vmatpush2.msra.mxu0 0.0
    %202 = vmatprep.subr.mxu0 0.0
    %203 = vmatpush2.msra.mxu0 0.0
    %204 = vmatprep.subr.mxu0 0.0
    %205 = vmatpush2.msra.mxu0 0.0
    %206 = vmatprep.subr.mxu0 0.0
    %207 = vmatpush2.msra.mxu0 0.0
    %208 = vmatprep.subr.mxu0 0.0
    %209 = vmatpush2.msra.mxu0 0.0
    %210 = vmatprep.subr.mxu0 0.0
    %211 = vmatpush2.msra.mxu0 0.0
    %212 = vmatprep.subr.mxu0 0.0
    %213 = vmatpush2.msra.mxu0 0.0
    %214 = vmatprep.subr.mxu0 0.0
    %215 = vmatpush2.msra.mxu0 0.0
    %216 = vmatprep.subr.mxu0 0.0
    %217 = vmatpush2.msra.mxu0 0.0
    %218 = vmatprep.subr.mxu0 0.0
    %219 = vmatpush2.msra.mxu0 0.0
    %220 = vmatprep.subr.mxu0 0.0
    %221 = vmatpush2.msra.mxu0 0.0
    %222 = vmatprep.subr.mxu0 0.0
    %223 = vmatpush2.msra.mxu0 0.0
    %224 = vmatprep.subr.mxu0 0.0
    %225 = vmatpush2.msra.mxu0 0.0
    %226 = vmatprep.subr.mxu0 0.0
    %227 = vmatpush2.msra.mxu0 0.0
    %228 = vmatprep.mubr.f32.mxu0 0.0
    %229 = vmatmul.mubr.f32.gmra.mxu0 %v145
    %v230 = vpop.f32.mrf.mxu0
    %v231 = vadd.f32 %v163, %v230
    %v232 = vpop.f32.mrf.mxu0
    %233 = vdwg.mxu0
    %v234 = vsub.f32 0.0, %v231
    %v235 = vmul.f32 %v234, 1.442695
    %v236 = vpow.pop %v235
    %v237 = vadd.f32 %v236, 1.0
    %v238 = vrcp.pop %v237
    %v239 = vsub.f32 1.0, %v238
    %vm240 = vcmask 7168
    %241 = vst.msk [vmem:[#allocation5] sm:$0xff] %vm240, %v239
    %243 = vrot.lane.b32.xlu0 %v238, 1
    %v244 = vpop.permute.xlu0 %243
    %vm246 = vcmask 15368
    %247 = vst.msk [vmem:[#allocation5] sm:$0xff] %vm246, %v244
    // Predicated region
    $region26: #{tpu_custom_call.1} parent=1 // pred_check
      _
    $region27: #{tpu_custom_call.1} parent=1 // pred_check_branch
      %249 = sbr.rel (0) target = $region29
    $region28: #{tpu_custom_call.1} parent=1 // pred_region
      // Predicated region
      $region30: #{tpu_custom_call.1} parent=28 // pred_check
        _
      $region31: #{tpu_custom_call.1} parent=28 // pred_check_branch
        %251 = sbr.rel (0) target = $region33
      $region32: #{tpu_custom_call.1} parent=28 // pred_region
        // Predicated region
        $region34: #{tpu_custom_call.1} parent=32 // pred_check
          _
        $region35: #{tpu_custom_call.1} parent=32 // pred_check_branch
          %253 = sbr.rel target = $region37
        $region36: #{tpu_custom_call.1} parent=32 // pred_region
          // Predicated region
          $region49: #{tpu_custom_call.1} parent=36 // pred_check
            _
          $region50: #{tpu_custom_call.1} parent=36 // pred_check_branch
            %269 = sbr.rel (0) target = $region52
          $region51: #{tpu_custom_call.1} parent=36 // pred_region
            %s271 = ssub.s32 16, 1
            loop: start=0, step=1, limit=1
            $region53: #{tpu_custom_call.1} parent=51 // loop_pre_header
              _
            $region54: #{tpu_custom_call.1} parent=51 // loop_header
              %s273 = sphi 0, %s277
              %p274 = scmp.ge.s32.totalorder %s273, 1
              %s278 = sphi [#allocation5], [#allocation5]
              %s279 = sphi %s5, %s5
            $region55: #{tpu_custom_call.1} parent=51 // loop_header_branch
              %276 = sbr.rel (%p274) target = $region59
            $region56: #{tpu_custom_call.1} parent=51 // loop_body
              %v280 = vld [vmem:[%s278] sm:%s271]
              %281 = vst [vmem:[%s279] sm:%s271] %v280
            $region57: #{tpu_custom_call.1} parent=51 // loop_footer
              %s277 = sadd.s32 1, %s273
            $region58: #{tpu_custom_call.1} parent=51 // loop_footer_branch
              %272 = sbr.rel target = $region54
            $region59: #{tpu_custom_call.1} parent=51 // loop_exit
              _
          $region52: #{tpu_custom_call.1} parent=36 // pred_fallthru
            _
        $region37: #{tpu_custom_call.1} parent=32 // pred_fallthru
          _
        // Predicated region
        $region38: #{tpu_custom_call.1} parent=32 // pred_check
          _
        $region39: #{tpu_custom_call.1} parent=32 // pred_check_branch
          %255 = sbr.rel (0) target = $region41
        $region40: #{tpu_custom_call.1} parent=32 // pred_region
          %s257 = ssub.s32 16, 1
          loop: start=0, step=1, limit=1
          $region42: #{tpu_custom_call.1} parent=40 // loop_pre_header
            _
          $region43: #{tpu_custom_call.1} parent=40 // loop_header
            %s259 = sphi 0, %s263
            %p260 = scmp.ge.s32.totalorder %s259, 1
            %s264 = sphi [#allocation5], [#allocation5]
            %s265 = sphi %s5, %s5
          $region44: #{tpu_custom_call.1} parent=40 // loop_header_branch
            %262 = sbr.rel (%p260) target = $region48
          $region45: #{tpu_custom_call.1} parent=40 // loop_body
            %v266 = vld [vmem:[%s264] sm:%s257]
            %267 = vst [vmem:[%s265] sm:%s257] %v266
          $region46: #{tpu_custom_call.1} parent=40 // loop_footer
            %s263 = sadd.s32 1, %s259
          $region47: #{tpu_custom_call.1} parent=40 // loop_footer_branch
            %258 = sbr.rel target = $region43
          $region48: #{tpu_custom_call.1} parent=40 // loop_exit
            _
        $region41: #{tpu_custom_call.1} parent=32 // pred_fallthru
          _
      $region33: #{tpu_custom_call.1} parent=28 // pred_fallthru
        _
      %282 = vnop
    $region29: #{tpu_custom_call.1} parent=1 // pred_fallthru
      _
    // Predicated region
    $region60: #{tpu_custom_call.1} parent=1 // pred_check
      _
    $region61: #{tpu_custom_call.1} parent=1 // pred_check_branch
      %284 = sbr.rel (0) target = $region63
    $region62: #{tpu_custom_call.1} parent=1 // pred_region
      _
    $region63: #{tpu_custom_call.1} parent=1 // pred_fallthru
      _
    %285 = vsyncpa [#allocation4], 1

</llo_original>
